<compile_context>
chip_gen: v5e
topology: v5e:2x2
jax: 0.10.0
libtpu: 0.0.40
codegen_flags: <defaults>
</compile_context>

<pallas_src>
import functools

import jax
import jax.numpy as jnp
from jax import lax
from jax.experimental import pallas as pl
from jax.experimental.pallas import tpu as pltpu

LANE = 128      # lane width: every feature (last) dim is padded to a multiple
SUBLANE = 8     # f32 sublane width: batch-tile granularity


def _round_up(x, m):
    return ((x + m - 1) // m) * m


def _cdiv(a, b):
    return -(-a // b)


def _fused_mlp_kernel(x_ref, w_in_ref, b_in_ref, *rest, num_hidden, matmul_dtype):
    """Whole MLP on one batch tile; all weights/biases resident in VMEM.

    x_ref:    (TILE_B, IN_PAD)           f32
    w_in_ref: (IN_PAD, UNITS_PAD)        matmul_dtype (bf16)
    b_in_ref: (1, UNITS_PAD)             f32
    rest (num_hidden > 0):
      w_hid_ref: (L, UNITS_PAD, UNITS_PAD)  matmul_dtype
      b_hid_ref: (L, 1, UNITS_PAD)          f32
      w_cls_ref: (UNITS_PAD, CLASSES_PAD)   matmul_dtype
      b_cls_ref: (1, CLASSES_PAD)           f32
      o_ref:     (TILE_B, CLASSES_PAD)      f32
    """
    if num_hidden > 0:
        w_hid_ref, b_hid_ref, w_cls_ref, b_cls_ref, o_ref = rest
    else:
        w_cls_ref, b_cls_ref, o_ref = rest

    # Input layer (no activation).  bf16 operands, f32 accumulate, f32 epilogue.
    h = jnp.dot(x_ref[...].astype(matmul_dtype), w_in_ref[...],
                preferred_element_type=jnp.float32) + b_in_ref[...]

    if num_hidden > 0:
        def body(li, h):
            y = jnp.dot(h.astype(matmul_dtype), w_hid_ref[li],
                        preferred_element_type=jnp.float32) + b_hid_ref[li]
            return jnp.maximum(y, 0.0)          # Linear -> ReLU
        h = lax.fori_loop(0, num_hidden, body, h)

    # Classifier (no activation).
    logits = jnp.dot(h.astype(matmul_dtype), w_cls_ref[...],
                     preferred_element_type=jnp.float32) + b_cls_ref[...]
    o_ref[...] = logits.astype(o_ref.dtype)


def relu_network_forward(x, params, *, tile_b=256, matmul_dtype=jnp.bfloat16):
    """Matches ReLUNetwork.forward (do_batch_norm=False) with one fused kernel.

    x:      (B, input_size) float32
    params: list of (W, b) with W shaped (F_in, F_out)  [input, hidden*, classifier]
    Returns (B, num_classes) float32.
    """
    B, in_size = x.shape
    n = len(params)
    assert n >= 2, "need at least input layer + classifier"
    num_units = params[0][0].shape[1]
    num_classes = params[-1][0].shape[1]
    num_hidden = n - 2

    # ---- lane-dense padding of all feature dims (multiples of 128) ----------
    in_pad = _round_up(in_size, LANE)
    units_pad = _round_up(num_units, LANE)
    classes_pad = _round_up(num_classes, LANE)

    def pad_w(w, rows, cols):
        return jnp.pad(w, ((0, rows - w.shape[0]),
                           (0, cols - w.shape[1]))).astype(matmul_dtype)

    def pad_b(b, cols):
        return jnp.pad(b, (0, cols - b.shape[0])).reshape(1, cols).astype(jnp.float32)

    w_in = pad_w(params[0][0], in_pad, units_pad)
    b_in = pad_b(params[0][1], units_pad)
    w_cls = pad_w(params[-1][0], units_pad, classes_pad)
    b_cls = pad_b(params[-1][1], classes_pad)

    param_arrays = [w_in, b_in]
    if num_hidden > 0:
        w_hid = jnp.stack([pad_w(w, units_pad, units_pad) for (w, _) in params[1:-1]])
        b_hid = jnp.stack([pad_b(b, units_pad) for (_, b) in params[1:-1]])
        param_arrays += [w_hid, b_hid]
    param_arrays += [w_cls, b_cls]

    # ---- balanced batch tiling (>=2 tiles when B >= 16, so both v7x TCs work)
    if B >= 2 * SUBLANE:
        n_tiles = max(_cdiv(B, tile_b), 2)
    else:
        n_tiles = _cdiv(B, tile_b)          # == 1
    tb = _round_up(_cdiv(B, n_tiles), SUBLANE)
    b_pad = _round_up(B, tb)
    grid = (b_pad // tb,)

    x_p = jnp.pad(x, ((0, b_pad - B), (0, in_pad - in_size)))

    # ---- VMEM budget / cost estimate ----------------------------------------
    weight_bytes = sum(int(a.size) * a.dtype.itemsize for a in param_arrays)
    io_bytes = 2 * (tb * in_pad + tb * classes_pad) * x.dtype.itemsize  # dbl-buffered tiles
    act_bytes = 3 * tb * max(in_pad, units_pad, classes_pad) * 4        # f32 temporaries
    flops = 2 * b_pad * (in_pad * units_pad
                         + num_hidden * units_pad * units_pad
                         + units_pad * classes_pad)
    bytes_accessed = (weight_bytes
                      + int(x_p.size) * x_p.dtype.itemsize
                      + b_pad * classes_pad * x.dtype.itemsize)
    cost = pl.CostEstimate(flops=int(flops), transcendentals=0,
                           bytes_accessed=int(bytes_accessed))

    # TODO(synk): if the resident (bf16) weight set exceeds ~40 MiB it will not
    # fit v7x's 64 MiB VMEM; a layer-tiled pltpu.emit_pipeline fallback over
    # pl.ANY weight blocks would be needed (not implemented for these sizes).

    kernel = functools.partial(_fused_mlp_kernel,
                               num_hidden=num_hidden,
                               matmul_dtype=matmul_dtype)

    def _call(single_buffer_weights):
        if single_buffer_weights:
            resident_kwargs = dict(pipeline_mode=pl.Buffered(1))
            weight_buffers = 1
        else:
            resident_kwargs = {}
            weight_buffers = 2

        def const_spec(shape):
            if len(shape) == 2:
                return pl.BlockSpec(shape, lambda i: (0, 0), **resident_kwargs)
            return pl.BlockSpec(shape, lambda i: (0, 0, 0), **resident_kwargs)

        in_specs = [pl.BlockSpec((tb, in_pad), lambda i: (i, 0))]
        in_specs += [const_spec(a.shape) for a in param_arrays]

        needed = weight_buffers * weight_bytes + io_bytes + act_bytes
        vmem_limit = int(min(max(2 * needed, 32 << 20), 100 << 20))

        return pl.pallas_call(
            kernel,
            out_shape=jax.ShapeDtypeStruct((b_pad, classes_pad), x.dtype),
            grid=grid,
            in_specs=in_specs,
            out_specs=pl.BlockSpec((tb, classes_pad), lambda i: (i, 0)),
            compiler_params=pltpu.CompilerParams(
                dimension_semantics=("parallel",),
                vmem_limit_bytes=vmem_limit),
            cost_estimate=cost,
        )(x_p, *param_arrays)

    try:
        out_p = _call(single_buffer_weights=True)
    except Exception:
        # pipeline_mode=Buffered(1) unavailable on this jax/Mosaic version:
        # fall back to default double-buffered resident weights.
        out_p = _call(single_buffer_weights=False)

    return out_p[:B, :num_classes]


def init_relu_network_params(key, input_size, num_layers, num_units, num_classes,
                             dtype=jnp.float32):
    """Deterministic parameter init (PyTorch-style uniform fan-in bound).

    Weights stored as (F_in, F_out) — the transpose of PyTorch's (F_out, F_in).
    """
    params = []

    def make_linear(k, f_in, f_out):
        kw, kb = jax.random.split(k)
        bound = 1.0 / jnp.sqrt(f_in)
        w = jax.random.uniform(kw, (f_in, f_out), dtype, -bound, bound)
        b = jax.random.uniform(kb, (f_out,), dtype, -bound, bound)
        return w, b

    keys = jax.random.split(key, num_layers + 2)
    params.append(make_linear(keys[0], input_size, num_units))        # input layer
    for i in range(num_layers):                                       # hidden layers
        params.append(make_linear(keys[1 + i], num_units, num_units))
    params.append(make_linear(keys[num_layers + 1], num_units, num_classes))  # classifier
    return params


def relu_network_ref(x, params):
    """Pure-JAX f32 reference (input Linear, [Linear+ReLU]*L, classifier Linear)."""
    n = len(params)
    w, b = params[0]
    out = x @ w + b
    for w, b in params[1:n - 1]:
        out = jnp.maximum(out @ w + b, 0.0)
    w, b = params[n - 1]
    return out @ w + b


# TODO(synk): do_batch_norm=True path (nn.BatchNorm1d with momentum=None) is not
# implemented; the module's default (do_batch_norm=False) forward is covered.

if __name__ == "__main__":
    # Small, module-consistent shapes.
    batch = 8
    input_size = 32
    num_layers = 2
    num_units = 32
    num_classes = 10

    key = jax.random.PRNGKey(0)
    kx, kp = jax.random.split(key)
    x = jax.random.normal(kx, (batch, input_size), jnp.float32)
    params = init_relu_network_params(kp, input_size, num_layers, num_units,
                                      num_classes)

    out = relu_network_forward(x, params)
    out = jax.block_until_ready(out)

    ref = relu_network_ref(x, params)
    assert out.shape == (batch, num_classes), out.shape
    # bf16 MXU operands with f32 accumulation: tolerance loosened vs f32 reference.
    max_err = jnp.max(jnp.abs(out - ref))
    assert jnp.allclose(out, ref, atol=5e-2, rtol=5e-2), f"max err {max_err}"

    print("KERNEL_OK")
</pallas_src>

<mosaic_0001>
module attributes {stable_mosaic.version = 11 : i64} {
  func.func @_fused_mlp_kernel(%arg0: i32, %arg1: memref<8x128xf32, #tpu.memory_space<vmem>>, %arg2: memref<128x128xbf16, #tpu.memory_space<vmem>>, %arg3: memref<1x128xf32, #tpu.memory_space<vmem>>, %arg4: memref<2x128x128xbf16, #tpu.memory_space<vmem>>, %arg5: memref<2x1x128xf32, #tpu.memory_space<vmem>>, %arg6: memref<128x128xbf16, #tpu.memory_space<vmem>>, %arg7: memref<1x128xf32, #tpu.memory_space<vmem>>, %arg8: memref<8x128xf32, #tpu.memory_space<vmem>>) attributes {dimension_semantics = [#tpu.dimension_semantics<parallel>], iteration_bounds = array<i64: 1>, scalar_prefetch = 0 : i64, scratch_operands = 0 : i64, tpu.core_type = #tpu.core_type<tc>, window_params = [{transform_indices = @transform_0, window_bounds = array<i64: 8, 128>}, {pipeline_mode = #tpu.pipeline_mode<synchronous>, transform_indices = @transform_1, window_bounds = array<i64: 128, 128>}, {pipeline_mode = #tpu.pipeline_mode<synchronous>, transform_indices = @transform_2, window_bounds = array<i64: 1, 128>}, {pipeline_mode = #tpu.pipeline_mode<synchronous>, transform_indices = @transform_3, window_bounds = array<i64: 2, 128, 128>}, {pipeline_mode = #tpu.pipeline_mode<synchronous>, transform_indices = @transform_4, window_bounds = array<i64: 2, 1, 128>}, {pipeline_mode = #tpu.pipeline_mode<synchronous>, transform_indices = @transform_5, window_bounds = array<i64: 128, 128>}, {pipeline_mode = #tpu.pipeline_mode<synchronous>, transform_indices = @transform_6, window_bounds = array<i64: 1, 128>}, {transform_indices = @transform_7, window_bounds = array<i64: 8, 128>}]} {
    %c0 = arith.constant 0 : index
    %c0_0 = arith.constant 0 : index
    %0 = vector.load %arg1[%c0, %c0_0] : memref<8x128xf32, #tpu.memory_space<vmem>>, vector<8x128xf32>
    %1 = arith.truncf %0 : vector<8x128xf32> to vector<8x128xbf16>
    %c0_1 = arith.constant 0 : index
    %c0_2 = arith.constant 0 : index
    %2 = vector.load %arg2[%c0_1, %c0_2] : memref<128x128xbf16, #tpu.memory_space<vmem>>, vector<128x128xbf16>
    %cst = arith.constant dense<0.000000e+00> : vector<8x128xf32>
    %3 = tpu.matmul %1, %2, %cst {dimension_numbers = #tpu.dot_dimension_numbers<[1], [0], [0], [1], [0, 0, 1, 1], [], []>} : vector<8x128xbf16>, vector<128x128xbf16>, vector<8x128xf32> -> vector<8x128xf32>
    %c0_3 = arith.constant 0 : index
    %c0_4 = arith.constant 0 : index
    %4 = vector.load %arg3[%c0_3, %c0_4] : memref<1x128xf32, #tpu.memory_space<vmem>>, vector<1x128xf32>
    %5 = vector.broadcast %4 : vector<1x128xf32> to vector<8x128xf32>
    %6 = arith.addf %3, %5 : vector<8x128xf32>
    %c0_i32 = arith.constant 0 : i32
    %c2_i32 = arith.constant 2 : i32
    %7 = arith.addi %c0_i32, %c2_i32 : i32
    %c1_i32 = arith.constant 1 : i32
    %8 = scf.for %arg9 = %c0_i32 to %7 step %c1_i32 iter_args(%arg10 = %6) -> (vector<8x128xf32>)  : i32 {
      %16 = arith.truncf %arg10 : vector<8x128xf32> to vector<8x128xbf16>
      %17 = arith.index_cast %arg9 : i32 to index
      %c0_13 = arith.constant 0 : index
      %c0_14 = arith.constant 0 : index
      %18 = vector.load %arg4[%17, %c0_13, %c0_14] : memref<2x128x128xbf16, #tpu.memory_space<vmem>>, vector<1x128x128xbf16>
      %19 = vector.shape_cast %18 : vector<1x128x128xbf16> to vector<128x128xbf16>
      %cst_15 = arith.constant dense<0.000000e+00> : vector<8x128xf32>
      %20 = tpu.matmul %16, %19, %cst_15 {dimension_numbers = #tpu.dot_dimension_numbers<[1], [0], [0], [1], [0, 0, 1, 1], [], []>} : vector<8x128xbf16>, vector<128x128xbf16>, vector<8x128xf32> -> vector<8x128xf32>
      %21 = arith.index_cast %arg9 : i32 to index
      %c0_16 = arith.constant 0 : index
      %c0_17 = arith.constant 0 : index
      %22 = vector.load %arg5[%21, %c0_16, %c0_17] : memref<2x1x128xf32, #tpu.memory_space<vmem>>, vector<1x1x128xf32>
      %23 = vector.shape_cast %22 : vector<1x1x128xf32> to vector<1x128xf32>
      %24 = vector.broadcast %23 : vector<1x128xf32> to vector<8x128xf32>
      %25 = arith.addf %20, %24 : vector<8x128xf32>
      %cst_18 = arith.constant 0.000000e+00 : f32
      %26 = vector.broadcast %cst_18 : f32 to vector<8x128xf32>
      %27 = arith.maximumf %25, %26 : vector<8x128xf32>
      scf.yield %27 : vector<8x128xf32>
    }
    %c2_i32_5 = arith.constant 2 : i32
    %9 = arith.truncf %8 : vector<8x128xf32> to vector<8x128xbf16>
    %c0_6 = arith.constant 0 : index
    %c0_7 = arith.constant 0 : index
    %10 = vector.load %arg6[%c0_6, %c0_7] : memref<128x128xbf16, #tpu.memory_space<vmem>>, vector<128x128xbf16>
    %cst_8 = arith.constant dense<0.000000e+00> : vector<8x128xf32>
    %11 = tpu.matmul %9, %10, %cst_8 {dimension_numbers = #tpu.dot_dimension_numbers<[1], [0], [0], [1], [0, 0, 1, 1], [], []>} : vector<8x128xbf16>, vector<128x128xbf16>, vector<8x128xf32> -> vector<8x128xf32>
    %c0_9 = arith.constant 0 : index
    %c0_10 = arith.constant 0 : index
    %12 = vector.load %arg7[%c0_9, %c0_10] : memref<1x128xf32, #tpu.memory_space<vmem>>, vector<1x128xf32>
    %13 = vector.broadcast %12 : vector<1x128xf32> to vector<8x128xf32>
    %14 = arith.addf %11, %13 : vector<8x128xf32>
    %c0_11 = arith.constant 0 : index
    %c0_12 = arith.constant 0 : index
    %15 = vector.load %arg8[%c0_11, %c0_12] : memref<8x128xf32, #tpu.memory_space<vmem>>, vector<8x128xf32>
    tpu.vector_store %arg8[%c0_11, %c0_12], %14 {strides = array<i32>} : memref<8x128xf32, #tpu.memory_space<vmem>>, vector<8x128xf32>,
    return
  }
  func.func @transform_0(%arg0: i32) -> (i32, i32) {
    %c0_i32 = arith.constant 0 : i32
    %c0_i32_0 = arith.constant 0 : i32
    return %arg0, %c0_i32 : i32, i32
  }
  func.func @transform_1(%arg0: i32) -> (i32, i32) {
    %c0_i32 = arith.constant 0 : i32
    %c0_i32_0 = arith.constant 0 : i32
    %c0_i32_1 = arith.constant 0 : i32
    return %c0_i32, %c0_i32_0 : i32, i32
  }
  func.func @transform_2(%arg0: i32) -> (i32, i32) {
    %c0_i32 = arith.constant 0 : i32
    %c0_i32_0 = arith.constant 0 : i32
    %c0_i32_1 = arith.constant 0 : i32
    return %c0_i32, %c0_i32_0 : i32, i32
  }
  func.func @transform_3(%arg0: i32) -> (i32, i32, i32) {
    %c0_i32 = arith.constant 0 : i32
    %c0_i32_0 = arith.constant 0 : i32
    %c0_i32_1 = arith.constant 0 : i32
    %c0_i32_2 = arith.constant 0 : i32
    return %c0_i32, %c0_i32_0, %c0_i32_1 : i32, i32, i32
  }
  func.func @transform_4(%arg0: i32) -> (i32, i32, i32) {
    %c0_i32 = arith.constant 0 : i32
    %c0_i32_0 = arith.constant 0 : i32
    %c0_i32_1 = arith.constant 0 : i32
    %c0_i32_2 = arith.constant 0 : i32
    return %c0_i32, %c0_i32_0, %c0_i32_1 : i32, i32, i32
  }
  func.func @transform_5(%arg0: i32) -> (i32, i32) {
    %c0_i32 = arith.constant 0 : i32
    %c0_i32_0 = arith.constant 0 : i32
    %c0_i32_1 = arith.constant 0 : i32
    return %c0_i32, %c0_i32_0 : i32, i32
  }
  func.func @transform_6(%arg0: i32) -> (i32, i32) {
    %c0_i32 = arith.constant 0 : i32
    %c0_i32_0 = arith.constant 0 : i32
    %c0_i32_1 = arith.constant 0 : i32
    return %c0_i32, %c0_i32_0 : i32, i32
  }
  func.func @transform_7(%arg0: i32) -> (i32, i32) {
    %c0_i32 = arith.constant 0 : i32
    %c0_i32_0 = arith.constant 0 : i32
    return %arg0, %c0_i32 : i32, i32
  }
}

module attributes {stable_mosaic.version = 11 : i64} {
  func.func @_fused_mlp_kernel(%arg0: i32, %arg1: memref<8x128xf32, #tpu.memory_space<vmem>>, %arg2: memref<128x128xbf16, #tpu.memory_space<vmem>>, %arg3: memref<1x128xf32, #tpu.memory_space<vmem>>, %arg4: memref<2x128x128xbf16, #tpu.memory_space<vmem>>, %arg5: memref<2x1x128xf32, #tpu.memory_space<vmem>>, %arg6: memref<128x128xbf16, #tpu.memory_space<vmem>>, %arg7: memref<1x128xf32, #tpu.memory_space<vmem>>, %arg8: memref<8x128xf32, #tpu.memory_space<vmem>>) attributes {dimension_semantics = [#tpu.dimension_semantics<parallel>], iteration_bounds = array<i64: 1>, scalar_prefetch = 0 : i64, scratch_operands = 0 : i64, tpu.core_type = #tpu.core_type<tc>, window_params = [{transform_indices = @transform_0, window_bounds = array<i64: 8, 128>}, {pipeline_mode = #tpu.pipeline_mode<synchronous>, transform_indices = @transform_1, window_bounds = array<i64: 128, 128>}, {pipeline_mode = #tpu.pipeline_mode<synchronous>, transform_indices = @transform_2, window_bounds = array<i64: 1, 128>}, {pipeline_mode = #tpu.pipeline_mode<synchronous>, transform_indices = @transform_3, window_bounds = array<i64: 2, 128, 128>}, {pipeline_mode = #tpu.pipeline_mode<synchronous>, transform_indices = @transform_4, window_bounds = array<i64: 2, 1, 128>}, {pipeline_mode = #tpu.pipeline_mode<synchronous>, transform_indices = @transform_5, window_bounds = array<i64: 128, 128>}, {pipeline_mode = #tpu.pipeline_mode<synchronous>, transform_indices = @transform_6, window_bounds = array<i64: 1, 128>}, {transform_indices = @transform_7, window_bounds = array<i64: 8, 128>}]} {
    %c0 = arith.constant 0 : index
    %c0_0 = arith.constant 0 : index
    %0 = vector.load %arg1[%c0, %c0_0] : memref<8x128xf32, #tpu.memory_space<vmem>>, vector<8x128xf32>
    %1 = arith.truncf %0 : vector<8x128xf32> to vector<8x128xbf16>
    %c0_1 = arith.constant 0 : index
    %c0_2 = arith.constant 0 : index
    %2 = vector.load %arg2[%c0_1, %c0_2] : memref<128x128xbf16, #tpu.memory_space<vmem>>, vector<128x128xbf16>
    %cst = arith.constant dense<0.000000e+00> : vector<8x128xf32>
    %3 = tpu.matmul %1, %2, %cst {dimension_numbers = #tpu.dot_dimension_numbers<[1], [0], [0], [1], [0, 0, 1, 1], [], []>} : vector<8x128xbf16>, vector<128x128xbf16>, vector<8x128xf32> -> vector<8x128xf32>
    %c0_3 = arith.constant 0 : index
    %c0_4 = arith.constant 0 : index
    %4 = vector.load %arg3[%c0_3, %c0_4] : memref<1x128xf32, #tpu.memory_space<vmem>>, vector<1x128xf32>
    %5 = vector.broadcast %4 : vector<1x128xf32> to vector<8x128xf32>
    %6 = arith.addf %3, %5 : vector<8x128xf32>
    %c0_i32 = arith.constant 0 : i32
    %c2_i32 = arith.constant 2 : i32
    %7 = arith.addi %c0_i32, %c2_i32 : i32
    %c1_i32 = arith.constant 1 : i32
    %8 = scf.for %arg9 = %c0_i32 to %7 step %c1_i32 iter_args(%arg10 = %6) -> (vector<8x128xf32>)  : i32 {
      %16 = arith.truncf %arg10 : vector<8x128xf32> to vector<8x128xbf16>
      %17 = arith.index_cast %arg9 : i32 to index
      %c0_13 = arith.constant 0 : index
      %c0_14 = arith.constant 0 : index
      %18 = vector.load %arg4[%17, %c0_13, %c0_14] : memref<2x128x128xbf16, #tpu.memory_space<vmem>>, vector<1x128x128xbf16>
      %19 = vector.shape_cast %18 : vector<1x128x128xbf16> to vector<128x128xbf16>
      %cst_15 = arith.constant dense<0.000000e+00> : vector<8x128xf32>
      %20 = tpu.matmul %16, %19, %cst_15 {dimension_numbers = #tpu.dot_dimension_numbers<[1], [0], [0], [1], [0, 0, 1, 1], [], []>} : vector<8x128xbf16>, vector<128x128xbf16>, vector<8x128xf32> -> vector<8x128xf32>
      %21 = arith.index_cast %arg9 : i32 to index
      %c0_16 = arith.constant 0 : index
      %c0_17 = arith.constant 0 : index
      %22 = vector.load %arg5[%21, %c0_16, %c0_17] : memref<2x1x128xf32, #tpu.memory_space<vmem>>, vector<1x1x128xf32>
      %23 = vector.shape_cast %22 : vector<1x1x128xf32> to vector<1x128xf32>
      %24 = vector.broadcast %23 : vector<1x128xf32> to vector<8x128xf32>
      %25 = arith.addf %20, %24 : vector<8x128xf32>
      %cst_18 = arith.constant 0.000000e+00 : f32
      %26 = vector.broadcast %cst_18 : f32 to vector<8x128xf32>
      %27 = arith.maximumf %25, %26 : vector<8x128xf32>
      scf.yield %27 : vector<8x128xf32>
    }
    %c2_i32_5 = arith.constant 2 : i32
    %9 = arith.truncf %8 : vector<8x128xf32> to vector<8x128xbf16>
    %c0_6 = arith.constant 0 : index
    %c0_7 = arith.constant 0 : index
    %10 = vector.load %arg6[%c0_6, %c0_7] : memref<128x128xbf16, #tpu.memory_space<vmem>>, vector<128x128xbf16>
    %cst_8 = arith.constant dense<0.000000e+00> : vector<8x128xf32>
    %11 = tpu.matmul %9, %10, %cst_8 {dimension_numbers = #tpu.dot_dimension_numbers<[1], [0], [0], [1], [0, 0, 1, 1], [], []>} : vector<8x128xbf16>, vector<128x128xbf16>, vector<8x128xf32> -> vector<8x128xf32>
    %c0_9 = arith.constant 0 : index
    %c0_10 = arith.constant 0 : index
    %12 = vector.load %arg7[%c0_9, %c0_10] : memref<1x128xf32, #tpu.memory_space<vmem>>, vector<1x128xf32>
    %13 = vector.broadcast %12 : vector<1x128xf32> to vector<8x128xf32>
    %14 = arith.addf %11, %13 : vector<8x128xf32>
    %c0_11 = arith.constant 0 : index
    %c0_12 = arith.constant 0 : index
    %15 = vector.load %arg8[%c0_11, %c0_12] : memref<8x128xf32, #tpu.memory_space<vmem>>, vector<8x128xf32>
    tpu.vector_store %arg8[%c0_11, %c0_12], %14 {strides = array<i32>} : memref<8x128xf32, #tpu.memory_space<vmem>>, vector<8x128xf32>,
    return
  }
  func.func @transform_0(%arg0: i32) -> (i32, i32) {
    %c0_i32 = arith.constant 0 : i32
    %c0_i32_0 = arith.constant 0 : i32
    return %arg0, %c0_i32 : i32, i32
  }
  func.func @transform_1(%arg0: i32) -> (i32, i32) {
    %c0_i32 = arith.constant 0 : i32
    %c0_i32_0 = arith.constant 0 : i32
    %c0_i32_1 = arith.constant 0 : i32
    return %c0_i32, %c0_i32_0 : i32, i32
  }
  func.func @transform_2(%arg0: i32) -> (i32, i32) {
    %c0_i32 = arith.constant 0 : i32
    %c0_i32_0 = arith.constant 0 : i32
    %c0_i32_1 = arith.constant 0 : i32
    return %c0_i32, %c0_i32_0 : i32, i32
  }
  func.func @transform_3(%arg0: i32) -> (i32, i32, i32) {
    %c0_i32 = arith.constant 0 : i32
    %c0_i32_0 = arith.constant 0 : i32
    %c0_i32_1 = arith.constant 0 : i32
    %c0_i32_2 = arith.constant 0 : i32
    return %c0_i32, %c0_i32_0, %c0_i32_1 : i32, i32, i32
  }
  func.func @transform_4(%arg0: i32) -> (i32, i32, i32) {
    %c0_i32 = arith.constant 0 : i32
    %c0_i32_0 = arith.constant 0 : i32
    %c0_i32_1 = arith.constant 0 : i32
    %c0_i32_2 = arith.constant 0 : i32
    return %c0_i32, %c0_i32_0, %c0_i32_1 : i32, i32, i32
  }
  func.func @transform_5(%arg0: i32) -> (i32, i32) {
    %c0_i32 = arith.constant 0 : i32
    %c0_i32_0 = arith.constant 0 : i32
    %c0_i32_1 = arith.constant 0 : i32
    return %c0_i32, %c0_i32_0 : i32, i32
  }
  func.func @transform_6(%arg0: i32) -> (i32, i32) {
    %c0_i32 = arith.constant 0 : i32
    %c0_i32_0 = arith.constant 0 : i32
    %c0_i32_1 = arith.constant 0 : i32
    return %c0_i32, %c0_i32_0 : i32, i32
  }
  func.func @transform_7(%arg0: i32) -> (i32, i32) {
    %c0_i32 = arith.constant 0 : i32
    %c0_i32_0 = arith.constant 0 : i32
    return %arg0, %c0_i32 : i32, i32
  }
}

</mosaic_0001>

<llo_original>
// kernel: tpu_custom_call.1
$region0: #{tpu_custom_call.1}
  #allocation0 [shape = 'u32[]', space=smem, size = 0x4, offset = 0x4, fixed_abs, tag = 'smem constant byte address 0x4 - core index']
  #allocation1 [shape = 'u32[72,128]{1,0:T(1,128)}', space=vmem, size = 0x9000, scoped, tag = 'internal scratch']
  %s0 = inlined_call_operand.hbm [shape: f32[8,128], index: 0, kind: input, shape index: {}]
  %s1 = inlined_call_operand.hbm [shape: bf16[128,128], index: 1, kind: input, shape index: {}]
  %s2 = inlined_call_operand.vmem [shape: f32[1,128], index: 2, kind: input, shape index: {}]
  %s3 = inlined_call_operand.hbm [shape: bf16[2,128,128], index: 3, kind: input, shape index: {}]
  %s4 = inlined_call_operand.vmem [shape: f32[2,1,128], index: 4, kind: input, shape index: {}]
  %s5 = inlined_call_operand.hbm [shape: bf16[128,128], index: 5, kind: input, shape index: {}]
  %s6 = inlined_call_operand.vmem [shape: f32[1,128], index: 6, kind: input, shape index: {}]
  %s7 = inlined_call_operand.hbm [shape: f32[8,128], index: 7, kind: output, shape index: {}]
  %s8 = sld [smem:[#allocation0]]
  $region61: #{tpu_custom_call.1} parent=0
    _
  %s10 = ssub.s32 1, %s8
  %s11 = scalar_select 0, %s10, %s8
  $region1: #{tpu_custom_call.1} parent=0
    #allocation2 [shape = 'u8[4096]{0}', space=vmem, size = 0x1000, scoped, tag = 'input window, operand 0, single buffered']
    #allocation3 [shape = 's32[1]{0}', space=sflag, size = 0x4, scoped, tag = 'scoped memory for tpu_custom_call.1']
    #allocation4 [shape = 's32[1]{0}', space=sflag, size = 0x4, scoped, tag = 'scoped memory for tpu_custom_call.1']
    #allocation5 [shape = 'u8[32768]{0}', space=vmem, size = 0x8000, scoped, tag = 'input window, operand 1, single buffered']
    #allocation6 [shape = 's32[1]{0}', space=sflag, size = 0x4, scoped, tag = 'scoped memory for tpu_custom_call.1']
    #allocation7 [shape = 'u8[65536]{0}', space=vmem, size = 0x10000, scoped, tag = 'input window, operand 3, single buffered']
    #allocation8 [shape = 'u8[32768]{0}', space=vmem, size = 0x8000, scoped, tag = 'input window, operand 5, single buffered']
    #allocation9 [shape = 's32[1]{0}', space=sflag, size = 0x4, scoped, tag = 'scoped memory for tpu_custom_call.1']
    #allocation10 [shape = 'u8[4096]{0}', space=vmem, size = 0x1000, scoped, tag = 'output window, operand 0, single buffered']
    %12 = vsyncpa [#allocation3], 0
    %13 = vsyncpa [#allocation6], 0
    %14 = vsyncpa [#allocation9], 0
    %15 = vsyncpa [#allocation4], 0
    // Predicated region
    $region2: #{tpu_custom_call.1} parent=1 // pred_check
      _
    $region3: #{tpu_custom_call.1} parent=1 // pred_check_branch
      %17 = sbr.rel (0) target = $region5
    $region4: #{tpu_custom_call.1} parent=1 // pred_region
      %19 = vsyncadd [#allocation3], 0
      %s21 = sshll.u32 %s0, 4
      %s22 = int_to_ptr.hbm [resolvable:$true] %s21
      %s23 = sshll.u32 [#allocation2], 4
      %s24 = int_to_ptr.vmem [resolvable:$true] %s23
      %26 = dma.hbm_to_vmem [thread:$0]  %s22, 128, %s24, [#allocation3]
    $region5: #{tpu_custom_call.1} parent=1 // pred_fallthru
      _
    // Predicated region
    $region6: #{tpu_custom_call.1} parent=1 // pred_check
      _
    $region7: #{tpu_custom_call.1} parent=1 // pred_check_branch
      %28 = sbr.rel (0) target = $region9
    $region8: #{tpu_custom_call.1} parent=1 // pred_region
      %30 = vsyncadd [#allocation6], 0
      %s31 = sshll.u32 %s1, 4
      %s32 = int_to_ptr.hbm [resolvable:$true] %s31
      %s33 = sshll.u32 [#allocation5], 4
      %s34 = int_to_ptr.vmem [resolvable:$true] %s33
      %39 = dma.hbm_to_vmem [thread:$0]  %s32, 1024, %s34, [#allocation6], 64, 64, 4
    $region9: #{tpu_custom_call.1} parent=1 // pred_fallthru
      _
    // Predicated region
    $region10: #{tpu_custom_call.1} parent=1 // pred_check
      _
    $region11: #{tpu_custom_call.1} parent=1 // pred_check_branch
      %41 = sbr.rel (0) target = $region13
    $region12: #{tpu_custom_call.1} parent=1 // pred_region
      _
    $region13: #{tpu_custom_call.1} parent=1 // pred_fallthru
      _
    // Predicated region
    $region14: #{tpu_custom_call.1} parent=1 // pred_check
      _
    $region15: #{tpu_custom_call.1} parent=1 // pred_check_branch
      %43 = sbr.rel (0) target = $region17
    $region16: #{tpu_custom_call.1} parent=1 // pred_region
      %45 = vsyncadd [#allocation6], 0
      %s46 = sshll.u32 %s3, 4
      %s47 = int_to_ptr.hbm [resolvable:$true] %s46
      %s48 = sshll.u32 [#allocation7], 4
      %s49 = int_to_ptr.vmem [resolvable:$true] %s48
      %54 = dma.hbm_to_vmem [thread:$0]  %s47, 2048, %s49, [#allocation6], 64, 64, 4
    $region17: #{tpu_custom_call.1} parent=1 // pred_fallthru
      _
    // Predicated region
    $region18: #{tpu_custom_call.1} parent=1 // pred_check
      _
    $region19: #{tpu_custom_call.1} parent=1 // pred_check_branch
      %56 = sbr.rel (0) target = $region21
    $region20: #{tpu_custom_call.1} parent=1 // pred_region
      _
    $region21: #{tpu_custom_call.1} parent=1 // pred_fallthru
      _
    // Predicated region
    $region22: #{tpu_custom_call.1} parent=1 // pred_check
      _
    $region23: #{tpu_custom_call.1} parent=1 // pred_check_branch
      %58 = sbr.rel (0) target = $region25
    $region24: #{tpu_custom_call.1} parent=1 // pred_region
      %60 = vsyncadd [#allocation9], 0
      %s61 = sshll.u32 %s5, 4
      %s62 = int_to_ptr.hbm [resolvable:$true] %s61
      %s63 = sshll.u32 [#allocation8], 4
      %s64 = int_to_ptr.vmem [resolvable:$true] %s63
      %69 = dma.hbm_to_vmem [thread:$0]  %s62, 1024, %s64, [#allocation9], 64, 64, 4
    $region25: #{tpu_custom_call.1} parent=1 // pred_fallthru
      _
    // Predicated region
    $region26: #{tpu_custom_call.1} parent=1 // pred_check
      _
    $region27: #{tpu_custom_call.1} parent=1 // pred_check_branch
      %71 = sbr.rel (0) target = $region29
    $region28: #{tpu_custom_call.1} parent=1 // pred_region
      _
    $region29: #{tpu_custom_call.1} parent=1 // pred_fallthru
      _
    // Predicated region
    $region30: #{tpu_custom_call.1} parent=1 // pred_check
      _
    $region31: #{tpu_custom_call.1} parent=1 // pred_check_branch
      %73 = sbr.rel (0) target = $region33
    $region32: #{tpu_custom_call.1} parent=1 // pred_region
      %75 = dma.done [#allocation3], 128
    $region33: #{tpu_custom_call.1} parent=1 // pred_fallthru
      _
    // Predicated region
    $region34: #{tpu_custom_call.1} parent=1 // pred_check
      _
    $region35: #{tpu_custom_call.1} parent=1 // pred_check_branch
      %77 = sbr.rel (0) target = $region37
    $region36: #{tpu_custom_call.1} parent=1 // pred_region
      %79 = dma.done [#allocation6], 1024
    $region37: #{tpu_custom_call.1} parent=1 // pred_fallthru
      _
    // Predicated region
    $region38: #{tpu_custom_call.1} parent=1 // pred_check
      _
    $region39: #{tpu_custom_call.1} parent=1 // pred_check_branch
      %81 = sbr.rel (0) target = $region41
    $region40: #{tpu_custom_call.1} parent=1 // pred_region
      %83 = dma.done [#allocation6], 2048
    $region41: #{tpu_custom_call.1} parent=1 // pred_fallthru
      _
    // Predicated region
    $region42: #{tpu_custom_call.1} parent=1 // pred_check
      _
    $region43: #{tpu_custom_call.1} parent=1 // pred_check_branch
      %85 = sbr.rel (0) target = $region45
    $region44: #{tpu_custom_call.1} parent=1 // pred_region
      %87 = dma.done [#allocation9], 1024
    $region45: #{tpu_custom_call.1} parent=1 // pred_fallthru
      _
    %v88 = vld [vmem:[#allocation2] sm:$0xff]
    %v89 = vpack.c.bf16 %v88, %v88
    %v90 = vld [vmem:[#allocation5] sm:$0xf]
    %v91 = vld [vmem:[#allocation5 + $0x4] sm:$0xf]
    %v92 = vld [vmem:[#allocation5 + $0x8] sm:$0xf]
    %v93 = vld [vmem:[#allocation5 + $0xc] sm:$0xf]
    %v94 = vld [vmem:[#allocation5 + $0x10] sm:$0xf]
    %v95 = vld [vmem:[#allocation5 + $0x14] sm:$0xf]
    %v96 = vld [vmem:[#allocation5 + $0x18] sm:$0xf]
    %v97 = vld [vmem:[#allocation5 + $0x1c] sm:$0xf]
    %v98 = vld [vmem:[#allocation5 + $0x20] sm:$0xf]
    %v99 = vld [vmem:[#allocation5 + $0x24] sm:$0xf]
    %v100 = vld [vmem:[#allocation5 + $0x28] sm:$0xf]
    %v101 = vld [vmem:[#allocation5 + $0x2c] sm:$0xf]
    %v102 = vld [vmem:[#allocation5 + $0x30] sm:$0xf]
    %v103 = vld [vmem:[#allocation5 + $0x34] sm:$0xf]
    %v104 = vld [vmem:[#allocation5 + $0x38] sm:$0xf]
    %v105 = vld [vmem:[#allocation5 + $0x3c] sm:$0xf]
    %v106 = vld [vmem:[%s2] sm:$0x1]
    %v108 = vperm.slane %v106, 0
    %v126 = vunpack.c.l.b16 %v90
    %v127 = vunpack.c.l.b16 %v91
    %v128 = vunpack.c.l.b16 %v92
    %v129 = vunpack.c.l.b16 %v93
    %v130 = vunpack.c.l.b16 %v94
    %v131 = vunpack.c.l.b16 %v95
    %v132 = vunpack.c.l.b16 %v96
    %v133 = vunpack.c.l.b16 %v97
    %v134 = vunpack.c.l.b16 %v98
    %v135 = vunpack.c.l.b16 %v99
    %v136 = vunpack.c.l.b16 %v100
    %v137 = vunpack.c.l.b16 %v101
    %v138 = vunpack.c.l.b16 %v102
    %v139 = vunpack.c.l.b16 %v103
    %v140 = vunpack.c.l.b16 %v104
    %v141 = vunpack.c.l.b16 %v105
    %v142 = vpack.c.b16 %v127, %v126
    %v143 = vpack.c.b16 %v129, %v128
    %v144 = vpack.c.b16 %v131, %v130
    %v145 = vpack.c.b16 %v133, %v132
    %v146 = vpack.c.b16 %v135, %v134
    %v147 = vpack.c.b16 %v137, %v136
    %v148 = vpack.c.b16 %v139, %v138
    %v149 = vpack.c.b16 %v141, %v140
    %158 = vmatpush.bf16.msra.mxu0 %v149
    %159 = vmatpush.bf16.msra.mxu0 %v148
    %160 = vmatpush.bf16.msra.mxu0 %v147
    %161 = vmatpush.bf16.msra.mxu0 %v146
    %162 = vmatpush.bf16.msra.mxu0 %v145
    %163 = vmatpush.bf16.msra.mxu0 %v144
    %164 = vmatpush.bf16.msra.mxu0 %v143
    %165 = vmatpush.bf16.msra.mxu0 %v142
    %166 = vmatmul.bf16.gmra.mxu0 %v89
    %v167 = vpop.f32.mrf.mxu0
    %v168 = vadd.f32 %v108, %v167
    %v169 = vpop.f32.mrf.mxu0
    %170 = vdwg.mxu0
    loop: start=0, step=1, limit=2
    $region46: #{tpu_custom_call.1} parent=1 // loop_pre_header
      _
    $region47: #{tpu_custom_call.1} parent=1 // loop_header
      %s172 = sphi 0, %s176
      %p173 = scmp.ge.s32.totalorder %s172, 2
      %v177 = vphi %v168, %v264
    $region48: #{tpu_custom_call.1} parent=1 // loop_header_branch
      %175 = sbr.rel (%p173) target = $region52
    $region49: #{tpu_custom_call.1} parent=1 // loop_body
      %v178 = vpack.c.bf16 %v177, %v177
      %s179 = smul.u32 %s172, 16
      %s180 = smul.addr %s179, 4
      %s181 = scalar_lea.vmem [#allocation7], %s180
      %v182 = vld [vmem:[%s181] sm:$0xf]
      %v183 = vld [vmem:[%s181 + $0x4] sm:$0xf]
      %v184 = vld [vmem:[%s181 + $0x8] sm:$0xf]
      %v185 = vld [vmem:[%s181 + $0xc] sm:$0xf]
      %v186 = vld [vmem:[%s181 + $0x10] sm:$0xf]
      %v187 = vld [vmem:[%s181 + $0x14] sm:$0xf]
      %v188 = vld [vmem:[%s181 + $0x18] sm:$0xf]
      %v189 = vld [vmem:[%s181 + $0x1c] sm:$0xf]
      %v190 = vld [vmem:[%s181 + $0x20] sm:$0xf]
      %v191 = vld [vmem:[%s181 + $0x24] sm:$0xf]
      %v192 = vld [vmem:[%s181 + $0x28] sm:$0xf]
      %v193 = vld [vmem:[%s181 + $0x2c] sm:$0xf]
      %v194 = vld [vmem:[%s181 + $0x30] sm:$0xf]
      %v195 = vld [vmem:[%s181 + $0x34] sm:$0xf]
      %v196 = vld [vmem:[%s181 + $0x38] sm:$0xf]
      %v197 = vld [vmem:[%s181 + $0x3c] sm:$0xf]
      %s198 = scalar_lea.vmem %s4, %s172
      %v199 = vld [vmem:[%s198] sm:$0x1]
      %v201 = vperm.slane %v199, 0
      %v219 = vunpack.c.l.b16 %v182
      %v220 = vunpack.c.l.b16 %v183
      %v221 = vunpack.c.l.b16 %v184
      %v222 = vunpack.c.l.b16 %v185
      %v223 = vunpack.c.l.b16 %v186
      %v224 = vunpack.c.l.b16 %v187
      %v225 = vunpack.c.l.b16 %v188
      %v226 = vunpack.c.l.b16 %v189
      %v227 = vunpack.c.l.b16 %v190
      %v228 = vunpack.c.l.b16 %v191
      %v229 = vunpack.c.l.b16 %v192
      %v230 = vunpack.c.l.b16 %v193
      %v231 = vunpack.c.l.b16 %v194
      %v232 = vunpack.c.l.b16 %v195
      %v233 = vunpack.c.l.b16 %v196
      %v234 = vunpack.c.l.b16 %v197
      %v235 = vpack.c.b16 %v220, %v219
      %v236 = vpack.c.b16 %v222, %v221
      %v237 = vpack.c.b16 %v224, %v223
      %v238 = vpack.c.b16 %v226, %v225
      %v239 = vpack.c.b16 %v228, %v227
      %v240 = vpack.c.b16 %v230, %v229
      %v241 = vpack.c.b16 %v232, %v231
      %v242 = vpack.c.b16 %v234, %v233
      %251 = vmatpush.bf16.msra.mxu0 %v242
      %252 = vmatpush.bf16.msra.mxu0 %v241
      %253 = vmatpush.bf16.msra.mxu0 %v240
      %254 = vmatpush.bf16.msra.mxu0 %v239
      %255 = vmatpush.bf16.msra.mxu0 %v238
      %256 = vmatpush.bf16.msra.mxu0 %v237
      %257 = vmatpush.bf16.msra.mxu0 %v236
      %258 = vmatpush.bf16.msra.mxu0 %v235
      %259 = vmatmul.bf16.gmra.mxu0 %v178
      %v260 = vpop.f32.mrf.mxu0
      %v261 = vadd.f32 %v201, %v260
      %v262 = vpop.f32.mrf.mxu0
      %263 = vdwg.mxu0
      %v264 = vmax.f32 %v261, 0.0
    $region50: #{tpu_custom_call.1} parent=1 // loop_footer
      %s176 = sadd.s32 1, %s172
    $region51: #{tpu_custom_call.1} parent=1 // loop_footer_branch
      %171 = sbr.rel target = $region47
    $region52: #{tpu_custom_call.1} parent=1 // loop_exit
      _
    %v265 = vpack.c.bf16 %v177, %v177
    %v266 = vld [vmem:[#allocation8] sm:$0xf]
    %v267 = vld [vmem:[#allocation8 + $0x4] sm:$0xf]
    %v268 = vld [vmem:[#allocation8 + $0x8] sm:$0xf]
    %v269 = vld [vmem:[#allocation8 + $0xc] sm:$0xf]
    %v270 = vld [vmem:[#allocation8 + $0x10] sm:$0xf]
    %v271 = vld [vmem:[#allocation8 + $0x14] sm:$0xf]
    %v272 = vld [vmem:[#allocation8 + $0x18] sm:$0xf]
    %v273 = vld [vmem:[#allocation8 + $0x1c] sm:$0xf]
    %v274 = vld [vmem:[#allocation8 + $0x20] sm:$0xf]
    %v275 = vld [vmem:[#allocation8 + $0x24] sm:$0xf]
    %v276 = vld [vmem:[#allocation8 + $0x28] sm:$0xf]
    %v277 = vld [vmem:[#allocation8 + $0x2c] sm:$0xf]
    %v278 = vld [vmem:[#allocation8 + $0x30] sm:$0xf]
    %v279 = vld [vmem:[#allocation8 + $0x34] sm:$0xf]
    %v280 = vld [vmem:[#allocation8 + $0x38] sm:$0xf]
    %v281 = vld [vmem:[#allocation8 + $0x3c] sm:$0xf]
    %v282 = vld [vmem:[%s6] sm:$0x1]
    %v284 = vperm.slane %v282, 0
    %v302 = vunpack.c.l.b16 %v266
    %v303 = vunpack.c.l.b16 %v267
    %v304 = vunpack.c.l.b16 %v268
    %v305 = vunpack.c.l.b16 %v269
    %v306 = vunpack.c.l.b16 %v270
    %v307 = vunpack.c.l.b16 %v271
    %v308 = vunpack.c.l.b16 %v272
    %v309 = vunpack.c.l.b16 %v273
    %v310 = vunpack.c.l.b16 %v274
    %v311 = vunpack.c.l.b16 %v275
    %v312 = vunpack.c.l.b16 %v276
    %v313 = vunpack.c.l.b16 %v277
    %v314 = vunpack.c.l.b16 %v278
    %v315 = vunpack.c.l.b16 %v279
    %v316 = vunpack.c.l.b16 %v280
    %v317 = vunpack.c.l.b16 %v281
    %v318 = vpack.c.b16 %v303, %v302
    %v319 = vpack.c.b16 %v305, %v304
    %v320 = vpack.c.b16 %v307, %v306
    %v321 = vpack.c.b16 %v309, %v308
    %v322 = vpack.c.b16 %v311, %v310
    %v323 = vpack.c.b16 %v313, %v312
    %v324 = vpack.c.b16 %v315, %v314
    %v325 = vpack.c.b16 %v317, %v316
    %334 = vmatpush.bf16.msra.mxu0 %v325
    %335 = vmatpush.bf16.msra.mxu0 %v324
    %336 = vmatpush.bf16.msra.mxu0 %v323
    %337 = vmatpush.bf16.msra.mxu0 %v322
    %338 = vmatpush.bf16.msra.mxu0 %v321
    %339 = vmatpush.bf16.msra.mxu0 %v320
    %340 = vmatpush.bf16.msra.mxu0 %v319
    %341 = vmatpush.bf16.msra.mxu0 %v318
    %342 = vmatmul.bf16.gmra.mxu0 %v265
    %v343 = vpop.f32.mrf.mxu0
    %v344 = vadd.f32 %v284, %v343
    %v345 = vpop.f32.mrf.mxu0
    %346 = vdwg.mxu0
    %347 = vst [vmem:[#allocation10] sm:$0xff] %v344
    // Predicated region
    $region53: #{tpu_custom_call.1} parent=1 // pred_check
      _
    $region54: #{tpu_custom_call.1} parent=1 // pred_check_branch
      %349 = sbr.rel (0) target = $region56
    $region55: #{tpu_custom_call.1} parent=1 // pred_region
      %351 = vsyncadd [#allocation4], 0
      %s353 = sshll.u32 [#allocation10], 4
      %s354 = int_to_ptr.vmem [resolvable:$true] %s353
      %s355 = sshll.u32 %s7, 4
      %s356 = int_to_ptr.hbm [resolvable:$true] %s355
      %358 = dma.vmem_to_hbm [thread:$0]  %s354, 128, %s356, [#allocation4]
    $region56: #{tpu_custom_call.1} parent=1 // pred_fallthru
      _
    // Predicated region
    $region57: #{tpu_custom_call.1} parent=1 // pred_check
      _
    $region58: #{tpu_custom_call.1} parent=1 // pred_check_branch
      %360 = sbr.rel (0) target = $region60
    $region59: #{tpu_custom_call.1} parent=1 // pred_region
      %362 = dma.done [#allocation4], 128
    $region60: #{tpu_custom_call.1} parent=1 // pred_fallthru
      _
    %363 = vsyncpa [#allocation3], 1
    %364 = vsyncpa [#allocation6], 1
    %365 = vsyncpa [#allocation9], 1
    %366 = vsyncpa [#allocation4], 1

// kernel: tpu_custom_call.1
$region0: #{tpu_custom_call.1}
  #allocation0 [shape = 'u32[]', space=smem, size = 0x4, offset = 0x4, fixed_abs, tag = 'smem constant byte address 0x4 - core index']
  #allocation1 [shape = 'u32[72,128]{1,0:T(1,128)}', space=vmem, size = 0x9000, scoped, tag = 'internal scratch']
  %s0 = inlined_call_operand.hbm [shape: f32[8,128], index: 0, kind: input, shape index: {}]
  %s1 = inlined_call_operand.hbm [shape: bf16[128,128], index: 1, kind: input, shape index: {}]
  %s2 = inlined_call_operand.vmem [shape: f32[1,128], index: 2, kind: input, shape index: {}]
  %s3 = inlined_call_operand.hbm [shape: bf16[2,128,128], index: 3, kind: input, shape index: {}]
  %s4 = inlined_call_operand.vmem [shape: f32[2,1,128], index: 4, kind: input, shape index: {}]
  %s5 = inlined_call_operand.hbm [shape: bf16[128,128], index: 5, kind: input, shape index: {}]
  %s6 = inlined_call_operand.vmem [shape: f32[1,128], index: 6, kind: input, shape index: {}]
  %s7 = inlined_call_operand.hbm [shape: f32[8,128], index: 7, kind: output, shape index: {}]
  %s8 = sld [smem:[#allocation0]]
  $region61: #{tpu_custom_call.1} parent=0
    _
  %s10 = ssub.s32 1, %s8
  %s11 = scalar_select 0, %s10, %s8
  $region1: #{tpu_custom_call.1} parent=0
    #allocation2 [shape = 'u8[4096]{0}', space=vmem, size = 0x1000, scoped, tag = 'input window, operand 0, single buffered']
    #allocation3 [shape = 's32[1]{0}', space=sflag, size = 0x4, scoped, tag = 'scoped memory for tpu_custom_call.1']
    #allocation4 [shape = 's32[1]{0}', space=sflag, size = 0x4, scoped, tag = 'scoped memory for tpu_custom_call.1']
    #allocation5 [shape = 'u8[32768]{0}', space=vmem, size = 0x8000, scoped, tag = 'input window, operand 1, single buffered']
    #allocation6 [shape = 's32[1]{0}', space=sflag, size = 0x4, scoped, tag = 'scoped memory for tpu_custom_call.1']
    #allocation7 [shape = 'u8[65536]{0}', space=vmem, size = 0x10000, scoped, tag = 'input window, operand 3, single buffered']
    #allocation8 [shape = 'u8[32768]{0}', space=vmem, size = 0x8000, scoped, tag = 'input window, operand 5, single buffered']
    #allocation9 [shape = 's32[1]{0}', space=sflag, size = 0x4, scoped, tag = 'scoped memory for tpu_custom_call.1']
    #allocation10 [shape = 'u8[4096]{0}', space=vmem, size = 0x1000, scoped, tag = 'output window, operand 0, single buffered']
    %12 = vsyncpa [#allocation3], 0
    %13 = vsyncpa [#allocation6], 0
    %14 = vsyncpa [#allocation9], 0
    %15 = vsyncpa [#allocation4], 0
    // Predicated region
    $region2: #{tpu_custom_call.1} parent=1 // pred_check
      _
    $region3: #{tpu_custom_call.1} parent=1 // pred_check_branch
      %17 = sbr.rel (0) target = $region5
    $region4: #{tpu_custom_call.1} parent=1 // pred_region
      %19 = vsyncadd [#allocation3], 0
      %s21 = sshll.u32 %s0, 4
      %s22 = int_to_ptr.hbm [resolvable:$true] %s21
      %s23 = sshll.u32 [#allocation2], 4
      %s24 = int_to_ptr.vmem [resolvable:$true] %s23
      %26 = dma.hbm_to_vmem [thread:$0]  %s22, 128, %s24, [#allocation3]
    $region5: #{tpu_custom_call.1} parent=1 // pred_fallthru
      _
    // Predicated region
    $region6: #{tpu_custom_call.1} parent=1 // pred_check
      _
    $region7: #{tpu_custom_call.1} parent=1 // pred_check_branch
      %28 = sbr.rel (0) target = $region9
    $region8: #{tpu_custom_call.1} parent=1 // pred_region
      %30 = vsyncadd [#allocation6], 0
      %s31 = sshll.u32 %s1, 4
      %s32 = int_to_ptr.hbm [resolvable:$true] %s31
      %s33 = sshll.u32 [#allocation5], 4
      %s34 = int_to_ptr.vmem [resolvable:$true] %s33
      %39 = dma.hbm_to_vmem [thread:$0]  %s32, 1024, %s34, [#allocation6], 64, 64, 4
    $region9: #{tpu_custom_call.1} parent=1 // pred_fallthru
      _
    // Predicated region
    $region10: #{tpu_custom_call.1} parent=1 // pred_check
      _
    $region11: #{tpu_custom_call.1} parent=1 // pred_check_branch
      %41 = sbr.rel (0) target = $region13
    $region12: #{tpu_custom_call.1} parent=1 // pred_region
      _
    $region13: #{tpu_custom_call.1} parent=1 // pred_fallthru
      _
    // Predicated region
    $region14: #{tpu_custom_call.1} parent=1 // pred_check
      _
    $region15: #{tpu_custom_call.1} parent=1 // pred_check_branch
      %43 = sbr.rel (0) target = $region17
    $region16: #{tpu_custom_call.1} parent=1 // pred_region
      %45 = vsyncadd [#allocation6], 0
      %s46 = sshll.u32 %s3, 4
      %s47 = int_to_ptr.hbm [resolvable:$true] %s46
      %s48 = sshll.u32 [#allocation7], 4
      %s49 = int_to_ptr.vmem [resolvable:$true] %s48
      %54 = dma.hbm_to_vmem [thread:$0]  %s47, 2048, %s49, [#allocation6], 64, 64, 4
    $region17: #{tpu_custom_call.1} parent=1 // pred_fallthru
      _
    // Predicated region
    $region18: #{tpu_custom_call.1} parent=1 // pred_check
      _
    $region19: #{tpu_custom_call.1} parent=1 // pred_check_branch
      %56 = sbr.rel (0) target = $region21
    $region20: #{tpu_custom_call.1} parent=1 // pred_region
      _
    $region21: #{tpu_custom_call.1} parent=1 // pred_fallthru
      _
    // Predicated region
    $region22: #{tpu_custom_call.1} parent=1 // pred_check
      _
    $region23: #{tpu_custom_call.1} parent=1 // pred_check_branch
      %58 = sbr.rel (0) target = $region25
    $region24: #{tpu_custom_call.1} parent=1 // pred_region
      %60 = vsyncadd [#allocation9], 0
      %s61 = sshll.u32 %s5, 4
      %s62 = int_to_ptr.hbm [resolvable:$true] %s61
      %s63 = sshll.u32 [#allocation8], 4
      %s64 = int_to_ptr.vmem [resolvable:$true] %s63
      %69 = dma.hbm_to_vmem [thread:$0]  %s62, 1024, %s64, [#allocation9], 64, 64, 4
    $region25: #{tpu_custom_call.1} parent=1 // pred_fallthru
      _
    // Predicated region
    $region26: #{tpu_custom_call.1} parent=1 // pred_check
      _
    $region27: #{tpu_custom_call.1} parent=1 // pred_check_branch
      %71 = sbr.rel (0) target = $region29
    $region28: #{tpu_custom_call.1} parent=1 // pred_region
      _
    $region29: #{tpu_custom_call.1} parent=1 // pred_fallthru
      _
    // Predicated region
    $region30: #{tpu_custom_call.1} parent=1 // pred_check
      _
    $region31: #{tpu_custom_call.1} parent=1 // pred_check_branch
      %73 = sbr.rel (0) target = $region33
    $region32: #{tpu_custom_call.1} parent=1 // pred_region
      %75 = dma.done [#allocation3], 128
    $region33: #{tpu_custom_call.1} parent=1 // pred_fallthru
      _
    // Predicated region
    $region34: #{tpu_custom_call.1} parent=1 // pred_check
      _
    $region35: #{tpu_custom_call.1} parent=1 // pred_check_branch
      %77 = sbr.rel (0) target = $region37
    $region36: #{tpu_custom_call.1} parent=1 // pred_region
      %79 = dma.done [#allocation6], 1024
    $region37: #{tpu_custom_call.1} parent=1 // pred_fallthru
      _
    // Predicated region
    $region38: #{tpu_custom_call.1} parent=1 // pred_check
      _
    $region39: #{tpu_custom_call.1} parent=1 // pred_check_branch
      %81 = sbr.rel (0) target = $region41
    $region40: #{tpu_custom_call.1} parent=1 // pred_region
      %83 = dma.done [#allocation6], 2048
    $region41: #{tpu_custom_call.1} parent=1 // pred_fallthru
      _
    // Predicated region
    $region42: #{tpu_custom_call.1} parent=1 // pred_check
      _
    $region43: #{tpu_custom_call.1} parent=1 // pred_check_branch
      %85 = sbr.rel (0) target = $region45
    $region44: #{tpu_custom_call.1} parent=1 // pred_region
      %87 = dma.done [#allocation9], 1024
    $region45: #{tpu_custom_call.1} parent=1 // pred_fallthru
      _
    %v88 = vld [vmem:[#allocation2] sm:$0xff]
    %v89 = vpack.c.bf16 %v88, %v88
    %v90 = vld [vmem:[#allocation5] sm:$0xf]
    %v91 = vld [vmem:[#allocation5 + $0x4] sm:$0xf]
    %v92 = vld [vmem:[#allocation5 + $0x8] sm:$0xf]
    %v93 = vld [vmem:[#allocation5 + $0xc] sm:$0xf]
    %v94 = vld [vmem:[#allocation5 + $0x10] sm:$0xf]
    %v95 = vld [vmem:[#allocation5 + $0x14] sm:$0xf]
    %v96 = vld [vmem:[#allocation5 + $0x18] sm:$0xf]
    %v97 = vld [vmem:[#allocation5 + $0x1c] sm:$0xf]
    %v98 = vld [vmem:[#allocation5 + $0x20] sm:$0xf]
    %v99 = vld [vmem:[#allocation5 + $0x24] sm:$0xf]
    %v100 = vld [vmem:[#allocation5 + $0x28] sm:$0xf]
    %v101 = vld [vmem:[#allocation5 + $0x2c] sm:$0xf]
    %v102 = vld [vmem:[#allocation5 + $0x30] sm:$0xf]
    %v103 = vld [vmem:[#allocation5 + $0x34] sm:$0xf]
    %v104 = vld [vmem:[#allocation5 + $0x38] sm:$0xf]
    %v105 = vld [vmem:[#allocation5 + $0x3c] sm:$0xf]
    %v106 = vld [vmem:[%s2] sm:$0x1]
    %v108 = vperm.slane %v106, 0
    %v126 = vunpack.c.l.b16 %v90
    %v127 = vunpack.c.l.b16 %v91
    %v128 = vunpack.c.l.b16 %v92
    %v129 = vunpack.c.l.b16 %v93
    %v130 = vunpack.c.l.b16 %v94
    %v131 = vunpack.c.l.b16 %v95
    %v132 = vunpack.c.l.b16 %v96
    %v133 = vunpack.c.l.b16 %v97
    %v134 = vunpack.c.l.b16 %v98
    %v135 = vunpack.c.l.b16 %v99
    %v136 = vunpack.c.l.b16 %v100
    %v137 = vunpack.c.l.b16 %v101
    %v138 = vunpack.c.l.b16 %v102
    %v139 = vunpack.c.l.b16 %v103
    %v140 = vunpack.c.l.b16 %v104
    %v141 = vunpack.c.l.b16 %v105
    %v142 = vpack.c.b16 %v127, %v126
    %v143 = vpack.c.b16 %v129, %v128
    %v144 = vpack.c.b16 %v131, %v130
    %v145 = vpack.c.b16 %v133, %v132
    %v146 = vpack.c.b16 %v135, %v134
    %v147 = vpack.c.b16 %v137, %v136
    %v148 = vpack.c.b16 %v139, %v138
    %v149 = vpack.c.b16 %v141, %v140
    %158 = vmatpush.bf16.msra.mxu0 %v149
    %159 = vmatpush.bf16.msra.mxu0 %v148
    %160 = vmatpush.bf16.msra.mxu0 %v147
    %161 = vmatpush.bf16.msra.mxu0 %v146
    %162 = vmatpush.bf16.msra.mxu0 %v145
    %163 = vmatpush.bf16.msra.mxu0 %v144
    %164 = vmatpush.bf16.msra.mxu0 %v143
    %165 = vmatpush.bf16.msra.mxu0 %v142
    %166 = vmatmul.bf16.gmra.mxu0 %v89
    %v167 = vpop.f32.mrf.mxu0
    %v168 = vadd.f32 %v108, %v167
    %v169 = vpop.f32.mrf.mxu0
    %170 = vdwg.mxu0
    loop: start=0, step=1, limit=2
    $region46: #{tpu_custom_call.1} parent=1 // loop_pre_header
      _
    $region47: #{tpu_custom_call.1} parent=1 // loop_header
      %s172 = sphi 0, %s176
      %p173 = scmp.ge.s32.totalorder %s172, 2
      %v177 = vphi %v168, %v264
    $region48: #{tpu_custom_call.1} parent=1 // loop_header_branch
      %175 = sbr.rel (%p173) target = $region52
    $region49: #{tpu_custom_call.1} parent=1 // loop_body
      %v178 = vpack.c.bf16 %v177, %v177
      %s179 = smul.u32 %s172, 16
      %s180 = smul.addr %s179, 4
      %s181 = scalar_lea.vmem [#allocation7], %s180
      %v182 = vld [vmem:[%s181] sm:$0xf]
      %v183 = vld [vmem:[%s181 + $0x4] sm:$0xf]
      %v184 = vld [vmem:[%s181 + $0x8] sm:$0xf]
      %v185 = vld [vmem:[%s181 + $0xc] sm:$0xf]
      %v186 = vld [vmem:[%s181 + $0x10] sm:$0xf]
      %v187 = vld [vmem:[%s181 + $0x14] sm:$0xf]
      %v188 = vld [vmem:[%s181 + $0x18] sm:$0xf]
      %v189 = vld [vmem:[%s181 + $0x1c] sm:$0xf]
      %v190 = vld [vmem:[%s181 + $0x20] sm:$0xf]
      %v191 = vld [vmem:[%s181 + $0x24] sm:$0xf]
      %v192 = vld [vmem:[%s181 + $0x28] sm:$0xf]
      %v193 = vld [vmem:[%s181 + $0x2c] sm:$0xf]
      %v194 = vld [vmem:[%s181 + $0x30] sm:$0xf]
      %v195 = vld [vmem:[%s181 + $0x34] sm:$0xf]
      %v196 = vld [vmem:[%s181 + $0x38] sm:$0xf]
      %v197 = vld [vmem:[%s181 + $0x3c] sm:$0xf]
      %s198 = scalar_lea.vmem %s4, %s172
      %v199 = vld [vmem:[%s198] sm:$0x1]
      %v201 = vperm.slane %v199, 0
      %v219 = vunpack.c.l.b16 %v182
      %v220 = vunpack.c.l.b16 %v183
      %v221 = vunpack.c.l.b16 %v184
      %v222 = vunpack.c.l.b16 %v185
      %v223 = vunpack.c.l.b16 %v186
      %v224 = vunpack.c.l.b16 %v187
      %v225 = vunpack.c.l.b16 %v188
      %v226 = vunpack.c.l.b16 %v189
      %v227 = vunpack.c.l.b16 %v190
      %v228 = vunpack.c.l.b16 %v191
      %v229 = vunpack.c.l.b16 %v192
      %v230 = vunpack.c.l.b16 %v193
      %v231 = vunpack.c.l.b16 %v194
      %v232 = vunpack.c.l.b16 %v195
      %v233 = vunpack.c.l.b16 %v196
      %v234 = vunpack.c.l.b16 %v197
      %v235 = vpack.c.b16 %v220, %v219
      %v236 = vpack.c.b16 %v222, %v221
      %v237 = vpack.c.b16 %v224, %v223
      %v238 = vpack.c.b16 %v226, %v225
      %v239 = vpack.c.b16 %v228, %v227
      %v240 = vpack.c.b16 %v230, %v229
      %v241 = vpack.c.b16 %v232, %v231
      %v242 = vpack.c.b16 %v234, %v233
      %251 = vmatpush.bf16.msra.mxu0 %v242
      %252 = vmatpush.bf16.msra.mxu0 %v241
      %253 = vmatpush.bf16.msra.mxu0 %v240
      %254 = vmatpush.bf16.msra.mxu0 %v239
      %255 = vmatpush.bf16.msra.mxu0 %v238
      %256 = vmatpush.bf16.msra.mxu0 %v237
      %257 = vmatpush.bf16.msra.mxu0 %v236
      %258 = vmatpush.bf16.msra.mxu0 %v235
      %259 = vmatmul.bf16.gmra.mxu0 %v178
      %v260 = vpop.f32.mrf.mxu0
      %v261 = vadd.f32 %v201, %v260
      %v262 = vpop.f32.mrf.mxu0
      %263 = vdwg.mxu0
      %v264 = vmax.f32 %v261, 0.0
    $region50: #{tpu_custom_call.1} parent=1 // loop_footer
      %s176 = sadd.s32 1, %s172
    $region51: #{tpu_custom_call.1} parent=1 // loop_footer_branch
      %171 = sbr.rel target = $region47
    $region52: #{tpu_custom_call.1} parent=1 // loop_exit
      _
    %v265 = vpack.c.bf16 %v177, %v177
    %v266 = vld [vmem:[#allocation8] sm:$0xf]
    %v267 = vld [vmem:[#allocation8 + $0x4] sm:$0xf]
    %v268 = vld [vmem:[#allocation8 + $0x8] sm:$0xf]
    %v269 = vld [vmem:[#allocation8 + $0xc] sm:$0xf]
    %v270 = vld [vmem:[#allocation8 + $0x10] sm:$0xf]
    %v271 = vld [vmem:[#allocation8 + $0x14] sm:$0xf]
    %v272 = vld [vmem:[#allocation8 + $0x18] sm:$0xf]
    %v273 = vld [vmem:[#allocation8 + $0x1c] sm:$0xf]
    %v274 = vld [vmem:[#allocation8 + $0x20] sm:$0xf]
    %v275 = vld [vmem:[#allocation8 + $0x24] sm:$0xf]
    %v276 = vld [vmem:[#allocation8 + $0x28] sm:$0xf]
    %v277 = vld [vmem:[#allocation8 + $0x2c] sm:$0xf]
    %v278 = vld [vmem:[#allocation8 + $0x30] sm:$0xf]
    %v279 = vld [vmem:[#allocation8 + $0x34] sm:$0xf]
    %v280 = vld [vmem:[#allocation8 + $0x38] sm:$0xf]
    %v281 = vld [vmem:[#allocation8 + $0x3c] sm:$0xf]
    %v282 = vld [vmem:[%s6] sm:$0x1]
    %v284 = vperm.slane %v282, 0
    %v302 = vunpack.c.l.b16 %v266
    %v303 = vunpack.c.l.b16 %v267
    %v304 = vunpack.c.l.b16 %v268
    %v305 = vunpack.c.l.b16 %v269
    %v306 = vunpack.c.l.b16 %v270
    %v307 = vunpack.c.l.b16 %v271
    %v308 = vunpack.c.l.b16 %v272
    %v309 = vunpack.c.l.b16 %v273
    %v310 = vunpack.c.l.b16 %v274
    %v311 = vunpack.c.l.b16 %v275
    %v312 = vunpack.c.l.b16 %v276
    %v313 = vunpack.c.l.b16 %v277
    %v314 = vunpack.c.l.b16 %v278
    %v315 = vunpack.c.l.b16 %v279
    %v316 = vunpack.c.l.b16 %v280
    %v317 = vunpack.c.l.b16 %v281
    %v318 = vpack.c.b16 %v303, %v302
    %v319 = vpack.c.b16 %v305, %v304
    %v320 = vpack.c.b16 %v307, %v306
    %v321 = vpack.c.b16 %v309, %v308
    %v322 = vpack.c.b16 %v311, %v310
    %v323 = vpack.c.b16 %v313, %v312
    %v324 = vpack.c.b16 %v315, %v314
    %v325 = vpack.c.b16 %v317, %v316
    %334 = vmatpush.bf16.msra.mxu0 %v325
    %335 = vmatpush.bf16.msra.mxu0 %v324
    %336 = vmatpush.bf16.msra.mxu0 %v323
    %337 = vmatpush.bf16.msra.mxu0 %v322
    %338 = vmatpush.bf16.msra.mxu0 %v321
    %339 = vmatpush.bf16.msra.mxu0 %v320
    %340 = vmatpush.bf16.msra.mxu0 %v319
    %341 = vmatpush.bf16.msra.mxu0 %v318
    %342 = vmatmul.bf16.gmra.mxu0 %v265
    %v343 = vpop.f32.mrf.mxu0
    %v344 = vadd.f32 %v284, %v343
    %v345 = vpop.f32.mrf.mxu0
    %346 = vdwg.mxu0
    %347 = vst [vmem:[#allocation10] sm:$0xff] %v344
    // Predicated region
    $region53: #{tpu_custom_call.1} parent=1 // pred_check
      _
    $region54: #{tpu_custom_call.1} parent=1 // pred_check_branch
      %349 = sbr.rel (0) target = $region56
    $region55: #{tpu_custom_call.1} parent=1 // pred_region
      %351 = vsyncadd [#allocation4], 0
      %s353 = sshll.u32 [#allocation10], 4
      %s354 = int_to_ptr.vmem [resolvable:$true] %s353
      %s355 = sshll.u32 %s7, 4
      %s356 = int_to_ptr.hbm [resolvable:$true] %s355
      %358 = dma.vmem_to_hbm [thread:$0]  %s354, 128, %s356, [#allocation4]
    $region56: #{tpu_custom_call.1} parent=1 // pred_fallthru
      _
    // Predicated region
    $region57: #{tpu_custom_call.1} parent=1 // pred_check
      _
    $region58: #{tpu_custom_call.1} parent=1 // pred_check_branch
      %360 = sbr.rel (0) target = $region60
    $region59: #{tpu_custom_call.1} parent=1 // pred_region
      %362 = dma.done [#allocation4], 128
    $region60: #{tpu_custom_call.1} parent=1 // pred_fallthru
      _
    %363 = vsyncpa [#allocation3], 1
    %364 = vsyncpa [#allocation6], 1
    %365 = vsyncpa [#allocation9], 1
    %366 = vsyncpa [#allocation4], 1

</llo_original>
